<compile_context>
chip_gen: v6e
topology: v6e:2x2x1
jax: 0.10.0
libtpu: 0.0.40
codegen_flags: <defaults>
</compile_context>

<pallas_src>
import math

import jax
import jax.numpy as jnp
from jax.experimental import pallas as pl
from jax.experimental.pallas import tpu as pltpu


# ----------------------------------------------------------------------------
# helpers
# ----------------------------------------------------------------------------
def _round_up(n, m):
    return ((n + m - 1) // m) * m


def _choose_seq_tile(S, cap, sublane_mult):
    """Largest tile <= cap that divides S, preferring 128-aligned tiles (keeps the
    lane-dense position block aligned) then sublane-aligned ones.  Bounded: never
    returns a silent full-extent block unless S itself has no usable divisor."""
    cap = max(1, min(cap, S))
    if S <= cap:
        return S
    for m in (128, sublane_mult):
        t = (cap // m) * m
        while t >= m:
            if S % t == 0:
                return t
            t -= m
    # Pathological S (e.g. prime): fall back to full extent.
    # TODO(synk): pad S to a multiple of 128 in the wrapper instead of blowing the
    # VMEM budget for such sequence lengths.
    return S


# ----------------------------------------------------------------------------
# 1) Standalone GemmaRotaryEmbedding.forward  ->  (cos, sin)
#    (API parity / tests only -- the fused kernel below never materializes these)
# ----------------------------------------------------------------------------
def _make_rope_embed_kernel(dim, base):
    half = dim // 2
    # inv_freq_i = base ** (-2*i/dim) = exp(-2*i*ln(base)/dim)
    scale = -2.0 * math.log(base) / dim

    def kernel(pos_ref, cos_ref, sin_ref):
        # pos_ref:         (1, TM)   int32, lane-dense
        # cos_ref/sin_ref: (TM, dim) out dtype (dim % 128 == 0 -> lane-dense stores)
        pos_row = pos_ref[...].astype(jnp.float32)                       # (1, TM)
        j = jax.lax.broadcasted_iota(jnp.int32, (half, 1), 0).astype(jnp.float32)
        inv_freq_col = jnp.exp(j * scale)                                # (half, 1)
        # Outer product in the transposed orientation (pure VPU broadcasts),
        # then one standard 2-D XLU transpose (XLU is idle here -> ~free).
        freqs_t = inv_freq_col * pos_row                                 # (half, TM)
        freqs = jnp.transpose(freqs_t)                                   # (TM, half)
        cos_h = jnp.cos(freqs)                                           # half-dim EUP work
        sin_h = jnp.sin(freqs)
        # emb = cat([freqs, freqs], -1): write both 128-aligned halves directly.
        cos_ref[:, :half] = cos_h.astype(cos_ref.dtype)
        cos_ref[:, half:] = cos_h.astype(cos_ref.dtype)
        sin_ref[:, :half] = sin_h.astype(sin_ref.dtype)
        sin_ref[:, half:] = sin_h.astype(sin_ref.dtype)

    return kernel


def gemma_rotary_embedding(x, position_ids, dim, base=10000.0, row_tile=1024):
    """GemmaRotaryEmbedding.forward -> (cos, sin), each (B, S, dim), dtype x.dtype.

    NOTE: kept for API parity / testing.  In the model hot path use
    apply_rotary_pos_emb_pallas (cos/sin never written to HBM)."""
    B, S = position_ids.shape
    out_dtype = x.dtype
    R = B * S

    if R <= row_tile:
        TM = _round_up(R, 8)            # single full-extent block
        R_pad = TM
    else:
        TM = max(128, (row_tile // 128) * 128)   # 128-aligned lanes (pos) & sublanes (out)
        R_pad = _round_up(R, TM)

    pos = position_ids.reshape(1, R).astype(jnp.int32)       # lane-dense
    if R_pad != R:
        pos = jnp.pad(pos, ((0, 0), (0, R_pad - R)))         # padded rows sliced off below

    kernel = _make_rope_embed_kernel(dim, base)
    cos, sin = pl.pallas_call(
        kernel,
        out_shape=(
            jax.ShapeDtypeStruct((R_pad, dim), out_dtype),
            jax.ShapeDtypeStruct((R_pad, dim), out_dtype),
        ),
        grid=(R_pad // TM,),
        in_specs=[pl.BlockSpec((1, TM), lambda i: (0, i))],
        out_specs=(
            pl.BlockSpec((TM, dim), lambda i: (i, 0)),
            pl.BlockSpec((TM, dim), lambda i: (i, 0)),
        ),
        compiler_params=pltpu.CompilerParams(
            dimension_semantics=("parallel",),
            vmem_limit_bytes=32 * 1024 * 1024,
        ),
    )(pos)

    cos = cos[:R].reshape(B, S, dim)
    sin = sin[:R].reshape(B, S, dim)
    return cos, sin


# ----------------------------------------------------------------------------
# 2) Fused rotary: one kernel computes cos/sin in-register and rotates q AND k
#    (matches apply_rotary_pos_emb(q, k, cos, sin, unsqueeze_dim=1))
# ----------------------------------------------------------------------------
def _make_fused_rope_kernel(dim, base, compute_dtype):
    half = dim // 2
    scale = -2.0 * math.log(base) / dim

    def kernel(pos_ref, q_ref, k_ref, qo_ref, ko_ref):
        # pos_ref:       (1, TS)     int32, lane-dense
        # q_ref/qo_ref:  (Hq, TS, D)
        # k_ref/ko_ref:  (Hk, TS, D)
        pos_row = pos_ref[...].astype(jnp.float32)                       # (1, TS)
        j = jax.lax.broadcasted_iota(jnp.int32, (half, 1), 0).astype(jnp.float32)
        inv_freq_col = jnp.exp(j * scale)                                # (half, 1)
        freqs_t = inv_freq_col * pos_row                                 # (half, TS) VPU
        freqs = jnp.transpose(freqs_t)                                   # (TS, half) XLU
        # half-dim transcendentals, shared by q AND k and all heads.
        c = jnp.cos(freqs)[None].astype(compute_dtype)                   # (1, TS, half)
        s = jnp.sin(freqs)[None].astype(compute_dtype)

        def rotate(x_ref, o_ref):
            x1 = x_ref[:, :, :half].astype(compute_dtype)                # (H, TS, half)
            x2 = x_ref[:, :, half:].astype(compute_dtype)
            # x*cos + rotate_half(x)*sin with cos=[c,c], sin=[s,s],
            # rotate_half(x)=[-x2, x1]; store each 128-lane-aligned half directly.
            o_ref[:, :, :half] = (x1 * c - x2 * s).astype(o_ref.dtype)
            o_ref[:, :, half:] = (x2 * c + x1 * s).astype(o_ref.dtype)

        rotate(q_ref, qo_ref)
        rotate(k_ref, ko_ref)

    return kernel


def apply_rotary_pos_emb_pallas(q, k, position_ids, base=10000.0,
                                vmem_budget_bytes=24 * 1024 * 1024,
                                compute_dtype=jnp.float32):
    """Fused GemmaRotaryEmbedding + apply_rotary_pos_emb.

    q: (B, Hq, S, D), k: (B, Hk, S, D), position_ids: (B, S) -> (q_embed, k_embed).
    cos/sin are computed in-kernel once per (batch, seq-tile), broadcast over the
    head axis of both tensors, and never written to HBM.

    compute_dtype: rotation math precision.  f32 is safe on all generations
    (v5e has no bf16 VALU); jnp.bfloat16 halves VALU work on v6e/v7x.
    """
    B, Hq, S, D = q.shape
    Bk, Hk, Sk, Dk = k.shape
    assert (B, S, D) == (Bk, Sk, Dk), "q/k batch, seq, head_dim must match"
    assert D % 2 == 0

    itemsize = jnp.dtype(q.dtype).itemsize
    # Per seq-row bytes of pipelined working set: (q_in + q_out + k_in + k_out)
    # times 2 for double buffering.
    per_row = 2 * 2 * (Hq + Hk) * D * itemsize
    cap = max(8, vmem_budget_bytes // per_row)
    sublane_mult = 16 if itemsize < 4 else 8
    TS = _choose_seq_tile(S, cap, sublane_mult)

    pos = position_ids.reshape(B, 1, S).astype(jnp.int32)    # lane-dense row per batch

    kernel = _make_fused_rope_kernel(D, base, compute_dtype)
    grid = (B, S // TS)                                       # both axes independent

    q_emb, k_emb = pl.pallas_call(
        kernel,
        out_shape=(
            jax.ShapeDtypeStruct(q.shape, q.dtype),
            jax.ShapeDtypeStruct(k.shape, k.dtype),
        ),
        grid=grid,
        in_specs=[
            pl.BlockSpec((None, 1, TS), lambda b, s: (b, 0, s)),
            pl.BlockSpec((None, Hq, TS, D), lambda b, s: (b, 0, s, 0)),
            pl.BlockSpec((None, Hk, TS, D), lambda b, s: (b, 0, s, 0)),
        ],
        out_specs=(
            pl.BlockSpec((None, Hq, TS, D), lambda b, s: (b, 0, s, 0)),
            pl.BlockSpec((None, Hk, TS, D), lambda b, s: (b, 0, s, 0)),
        ),
        compiler_params=pltpu.CompilerParams(
            dimension_semantics=("parallel", "parallel"),
            vmem_limit_bytes=48 * 1024 * 1024,   # > v5e's 16 MiB default, < v7x's 64 MiB
        ),
    )(pos, q, k)
    return q_emb, k_emb


# ----------------------------------------------------------------------------
# pure-JAX references (match the PyTorch module semantics, f32 math)
# ----------------------------------------------------------------------------
def _rope_reference_f32(position_ids, dim, base=10000.0):
    inv_freq = 1.0 / (base ** (jnp.arange(0, dim, 2, dtype=jnp.float32) / dim))
    freqs = position_ids.astype(jnp.float32)[:, :, None] * inv_freq[None, None, :]
    emb = jnp.concatenate([freqs, freqs], axis=-1)
    return jnp.cos(emb), jnp.sin(emb)


def _rotate_half(x):
    half = x.shape[-1] // 2
    return jnp.concatenate([-x[..., half:], x[..., :half]], axis=-1)


def _apply_reference_f32(q, k, cos, sin):
    c = cos[:, None, :, :]
    s = sin[:, None, :, :]
    qf = q.astype(jnp.float32)
    kf = k.astype(jnp.float32)
    return qf * c + _rotate_half(qf) * s, kf * c + _rotate_half(kf) * s


# ----------------------------------------------------------------------------
if __name__ == "__main__":
    key = jax.random.PRNGKey(0)
    B, S = 2, 8
    num_heads, num_kv_heads, head_dim = 4, 1, 256   # Gemma default head_dim=256 (GQA k)
    base = 10000.0

    k1, k2, k3 = jax.random.split(key, 3)
    q = jax.random.normal(k1, (B, num_heads, S, head_dim), dtype=jnp.bfloat16)
    k = jax.random.normal(k2, (B, num_kv_heads, S, head_dim), dtype=jnp.bfloat16)
    position_ids = jax.random.randint(k3, (B, S), 0, 2048, dtype=jnp.int32)

    # 1) GemmaRotaryEmbedding.forward (parity/test path only -- NOT the hot path)
    cos, sin = gemma_rotary_embedding(q, position_ids, head_dim, base=base)
    # 2) fused apply_rotary_pos_emb: single launch, cos/sin never written to HBM
    q_emb, k_emb = apply_rotary_pos_emb_pallas(q, k, position_ids, base=base)
    jax.block_until_ready((cos, sin, q_emb, k_emb))

    # -- checks ---------------------------------------------------------------
    cos_ref, sin_ref = _rope_reference_f32(position_ids, head_dim, base=base)
    q_ref, k_ref = _apply_reference_f32(q, k, cos_ref, sin_ref)

    assert cos.shape == (B, S, head_dim) and sin.shape == (B, S, head_dim)
    assert cos.dtype == q.dtype and sin.dtype == q.dtype
    assert q_emb.shape == q.shape and q_emb.dtype == q.dtype
    assert k_emb.shape == k.shape and k_emb.dtype == k.dtype

    assert jnp.allclose(cos.astype(jnp.float32), cos_ref, atol=1e-2)
    assert jnp.allclose(sin.astype(jnp.float32), sin_ref, atol=1e-2)
    assert jnp.allclose(q_emb.astype(jnp.float32), q_ref, atol=5e-2)
    assert jnp.allclose(k_emb.astype(jnp.float32), k_ref, atol=5e-2)

    print("KERNEL_OK")
</pallas_src>

<mosaic_0001>
module attributes {stable_mosaic.version = 11 : i64} {
  func.func @kernel(%arg0: i32, %arg1: memref<1x16xi32, #tpu.memory_space<vmem>>, %arg2: memref<16x256xbf16, #tpu.memory_space<vmem>>, %arg3: memref<16x256xbf16, #tpu.memory_space<vmem>>) attributes {dimension_semantics = [#tpu.dimension_semantics<parallel>], iteration_bounds = array<i64: 1>, scalar_prefetch = 0 : i64, scratch_operands = 0 : i64, tpu.core_type = #tpu.core_type<tc>, window_params = [{transform_indices = @transform_0, window_bounds = array<i64: 1, 16>}, {transform_indices = @transform_1, window_bounds = array<i64: 16, 256>}, {transform_indices = @transform_2, window_bounds = array<i64: 16, 256>}]} {
    %c0 = arith.constant 0 : index
    %c0_0 = arith.constant 0 : index
    %0 = vector.load %arg1[%c0, %c0_0] : memref<1x16xi32, #tpu.memory_space<vmem>>, vector<1x16xi32>
    %1 = arith.sitofp %0 : vector<1x16xi32> to vector<1x16xf32>
    %2 = tpu.iota {dimensions = array<i32: 0>} : vector<128x1xi32>
    %3 = arith.sitofp %2 : vector<128x1xi32> to vector<128x1xf32>
    %cst = arith.constant -0.0719557852 : f32
    %4 = vector.broadcast %cst : f32 to vector<128x1xf32>
    %5 = arith.mulf %3, %4 : vector<128x1xf32>
    %6 = math.exp %5 : vector<128x1xf32>
    %7 = vector.broadcast %6 : vector<128x1xf32> to vector<128x16xf32>
    %8 = vector.broadcast %1 : vector<1x16xf32> to vector<128x16xf32>
    %9 = arith.mulf %7, %8 : vector<128x16xf32>
    %10 = tpu.transpose %9, [1, 0] : vector<128x16xf32> -> vector<16x128xf32>
    %11 = math.cos %10 : vector<16x128xf32>
    %12 = math.sin %10 : vector<16x128xf32>
    %13 = arith.truncf %11 : vector<16x128xf32> to vector<16x128xbf16>
    %c0_1 = arith.constant 0 : index
    %c0_2 = arith.constant 0 : index
    %14 = vector.load %arg2[%c0_1, %c0_2] : memref<16x256xbf16, #tpu.memory_space<vmem>>, vector<16x128xbf16>
    tpu.vector_store %arg2[%c0_1, %c0_2], %13 {strides = array<i32>} : memref<16x256xbf16, #tpu.memory_space<vmem>>, vector<16x128xbf16>,
    %15 = arith.truncf %11 : vector<16x128xf32> to vector<16x128xbf16>
    %c0_3 = arith.constant 0 : index
    %c128 = arith.constant 128 : index
    %16 = vector.load %arg2[%c0_3, %c128] : memref<16x256xbf16, #tpu.memory_space<vmem>>, vector<16x128xbf16>
    tpu.vector_store %arg2[%c0_3, %c128], %15 {strides = array<i32>} : memref<16x256xbf16, #tpu.memory_space<vmem>>, vector<16x128xbf16>,
    %17 = arith.truncf %12 : vector<16x128xf32> to vector<16x128xbf16>
    %c0_4 = arith.constant 0 : index
    %c0_5 = arith.constant 0 : index
    %18 = vector.load %arg3[%c0_4, %c0_5] : memref<16x256xbf16, #tpu.memory_space<vmem>>, vector<16x128xbf16>
    tpu.vector_store %arg3[%c0_4, %c0_5], %17 {strides = array<i32>} : memref<16x256xbf16, #tpu.memory_space<vmem>>, vector<16x128xbf16>,
    %19 = arith.truncf %12 : vector<16x128xf32> to vector<16x128xbf16>
    %c0_6 = arith.constant 0 : index
    %c128_7 = arith.constant 128 : index
    %20 = vector.load %arg3[%c0_6, %c128_7] : memref<16x256xbf16, #tpu.memory_space<vmem>>, vector<16x128xbf16>
    tpu.vector_store %arg3[%c0_6, %c128_7], %19 {strides = array<i32>} : memref<16x256xbf16, #tpu.memory_space<vmem>>, vector<16x128xbf16>,
    return
  }
  func.func @transform_0(%arg0: i32) -> (i32, i32) {
    %c0_i32 = arith.constant 0 : i32
    %c0_i32_0 = arith.constant 0 : i32
    return %c0_i32, %arg0 : i32, i32
  }
  func.func @transform_1(%arg0: i32) -> (i32, i32) {
    %c0_i32 = arith.constant 0 : i32
    %c0_i32_0 = arith.constant 0 : i32
    return %arg0, %c0_i32 : i32, i32
  }
  func.func @transform_2(%arg0: i32) -> (i32, i32) {
    %c0_i32 = arith.constant 0 : i32
    %c0_i32_0 = arith.constant 0 : i32
    return %arg0, %c0_i32 : i32, i32
  }
}

</mosaic_0001>

<llo_original>
// kernel: tpu_custom_call.1
$region0: #{tpu_custom_call.1}
  #allocation0 [shape = 'u32[]', space=smem, size = 0x4, offset = 0x4, fixed_abs, tag = 'smem constant byte address 0x4 - core index']
  #allocation1 [shape = 'u32[144,128]{1,0:T(1,128)}', space=vmem, size = 0x12000, scoped, tag = 'internal scratch']
  %s0 = inlined_call_operand.hbm [shape: s32[1,16], index: 0, kind: input, shape index: {}]
  %s1 = inlined_call_operand.hbm [shape: bf16[16,256], index: 1, kind: output, shape index: {0}]
  %s2 = inlined_call_operand.hbm [shape: bf16[16,256], index: 2, kind: output, shape index: {1}]
  %3 = xla_tuple %s1, %s2
  %s4 = sld [smem:[#allocation0]]
  $region26: #{tpu_custom_call.1} parent=0
    _
  %s6 = ssub.s32 1, %s4
  %s7 = scalar_select 0, %s6, %s4
  $region1: #{tpu_custom_call.1} parent=0
    #allocation2 [shape = 'u8[512]{0}', space=vmem, size = 0x400, scoped, tag = 'input window, operand 0, single buffered']
    #allocation3 [shape = 's32[1]{0}', space=sflag, size = 0x4, scoped, tag = 'scoped memory for tpu_custom_call.1']
    #allocation4 [shape = 's32[1]{0}', space=sflag, size = 0x4, scoped, tag = 'scoped memory for tpu_custom_call.1']
    #allocation5 [shape = 'u8[8192]{0}', space=vmem, size = 0x2000, scoped, tag = 'output window, operand 0, single buffered']
    #allocation6 [shape = 'u8[8192]{0}', space=vmem, size = 0x2000, scoped, tag = 'output window, operand 1, single buffered']
    #allocation7 [shape = 's32[1]{0}', space=sflag, size = 0x4, scoped, tag = 'scoped memory for tpu_custom_call.1']
    %8 = vsyncpa [#allocation3], 0
    %9 = vsyncpa [#allocation4], 0
    %10 = vsyncpa [#allocation7], 0
    // Predicated region
    $region2: #{tpu_custom_call.1} parent=1 // pred_check
      _
    $region3: #{tpu_custom_call.1} parent=1 // pred_check_branch
      %12 = sbr.rel (0) target = $region5
    $region4: #{tpu_custom_call.1} parent=1 // pred_region
      %s14 = ssub.s32 16, 16
      %15 = vsyncadd [#allocation3], %s14
      %s17 = sshll.u32 [#allocation2], 4
      %s18 = int_to_ptr.vmem [resolvable:$true] %s17
      %20 = dma.hbm_to_vmem [thread:$0]  %s0, 16, %s18, [#allocation3]
    $region5: #{tpu_custom_call.1} parent=1 // pred_fallthru
      _
    // Predicated region
    $region6: #{tpu_custom_call.1} parent=1 // pred_check
      _
    $region7: #{tpu_custom_call.1} parent=1 // pred_check_branch
      %22 = sbr.rel (0) target = $region9
    $region8: #{tpu_custom_call.1} parent=1 // pred_region
      %23 = dma.done [#allocation3], 16
    $region9: #{tpu_custom_call.1} parent=1 // pred_fallthru
      _
    %v24 = vld [vmem:[#allocation2] sm:$0x1]
    %v25 = vcvt.s32.f32 %v24
    %v26 = vlaneseq
    %v27 = vshrl.u32 %v26, 7
    %v28 = vadd.s32 %v27, 8
    %v29 = vadd.s32 %v27, 16
    %v30 = vadd.s32 %v27, 24
    %v31 = vadd.s32 %v27, 32
    %v32 = vadd.s32 %v27, 40
    %v33 = vadd.s32 %v27, 48
    %v34 = vadd.s32 %v27, 56
    %v35 = vadd.s32 %v27, 64
    %v36 = vadd.s32 %v27, 72
    %v37 = vadd.s32 %v27, 80
    %v38 = vadd.s32 %v27, 88
    %v39 = vadd.s32 %v27, 96
    %v40 = vadd.s32 %v27, 104
    %v41 = vadd.s32 %v27, 112
    %v42 = vadd.s32 %v27, 120
    %v43 = vcvt.s32.f32 %v27
    %v44 = vcvt.s32.f32 %v28
    %v45 = vcvt.s32.f32 %v29
    %v46 = vcvt.s32.f32 %v30
    %v47 = vcvt.s32.f32 %v31
    %v48 = vcvt.s32.f32 %v32
    %v49 = vcvt.s32.f32 %v33
    %v50 = vcvt.s32.f32 %v34
    %v51 = vcvt.s32.f32 %v35
    %v52 = vcvt.s32.f32 %v36
    %v53 = vcvt.s32.f32 %v37
    %v54 = vcvt.s32.f32 %v38
    %v55 = vcvt.s32.f32 %v39
    %v56 = vcvt.s32.f32 %v40
    %v57 = vcvt.s32.f32 %v41
    %v58 = vcvt.s32.f32 %v42
    %v59 = vmul.f32 %v43, -0.071955785
    %v60 = vmul.f32 %v44, -0.071955785
    %v61 = vmul.f32 %v45, -0.071955785
    %v62 = vmul.f32 %v46, -0.071955785
    %v63 = vmul.f32 %v47, -0.071955785
    %v64 = vmul.f32 %v48, -0.071955785
    %v65 = vmul.f32 %v49, -0.071955785
    %v66 = vmul.f32 %v50, -0.071955785
    %v67 = vmul.f32 %v51, -0.071955785
    %v68 = vmul.f32 %v52, -0.071955785
    %v69 = vmul.f32 %v53, -0.071955785
    %v70 = vmul.f32 %v54, -0.071955785
    %v71 = vmul.f32 %v55, -0.071955785
    %v72 = vmul.f32 %v56, -0.071955785
    %v73 = vmul.f32 %v57, -0.071955785
    %v74 = vmul.f32 %v58, -0.071955785
    %v75 = vmul.f32 %v59, 1.442695
    %v76 = vpow.pop %v75
    %v77 = vmul.f32 %v60, 1.442695
    %v78 = vpow.pop %v77
    %v79 = vmul.f32 %v61, 1.442695
    %v80 = vpow.pop %v79
    %v81 = vmul.f32 %v62, 1.442695
    %v82 = vpow.pop %v81
    %v83 = vmul.f32 %v63, 1.442695
    %v84 = vpow.pop %v83
    %v85 = vmul.f32 %v64, 1.442695
    %v86 = vpow.pop %v85
    %v87 = vmul.f32 %v65, 1.442695
    %v88 = vpow.pop %v87
    %v89 = vmul.f32 %v66, 1.442695
    %v90 = vpow.pop %v89
    %v91 = vmul.f32 %v67, 1.442695
    %v92 = vpow.pop %v91
    %v93 = vmul.f32 %v68, 1.442695
    %v94 = vpow.pop %v93
    %v95 = vmul.f32 %v69, 1.442695
    %v96 = vpow.pop %v95
    %v97 = vmul.f32 %v70, 1.442695
    %v98 = vpow.pop %v97
    %v99 = vmul.f32 %v71, 1.442695
    %v100 = vpow.pop %v99
    %v101 = vmul.f32 %v72, 1.442695
    %v102 = vpow.pop %v101
    %v103 = vmul.f32 %v73, 1.442695
    %v104 = vpow.pop %v103
    %v105 = vmul.f32 %v74, 1.442695
    %v106 = vpow.pop %v105
    %v108 = vlaneseq
    %v109 = vshrl.u32 %v108, 7
    %v110 = vsub.s32 0, %v109
    %v111 = vrot.slane %v25, %v110
    %v113 = vmul.f32 %v76, %v111
    %v114 = vmul.f32 %v78, %v111
    %v115 = vmul.f32 %v80, %v111
    %v116 = vmul.f32 %v82, %v111
    %v117 = vmul.f32 %v84, %v111
    %v118 = vmul.f32 %v86, %v111
    %v119 = vmul.f32 %v88, %v111
    %v120 = vmul.f32 %v90, %v111
    %v121 = vmul.f32 %v92, %v111
    %v122 = vmul.f32 %v94, %v111
    %v123 = vmul.f32 %v96, %v111
    %v124 = vmul.f32 %v98, %v111
    %v125 = vmul.f32 %v100, %v111
    %v126 = vmul.f32 %v102, %v111
    %v127 = vmul.f32 %v104, %v111
    %v128 = vmul.f32 %v106, %v111
    %129 = vxpose.xlu0.b32.start [1/16] %v113, 128
    %130 = vxpose.xlu0.b32.cont [2/16] %v114, 128
    %131 = vxpose.xlu0.b32.cont [3/16] %v115, 128
    %132 = vxpose.xlu0.b32.cont [4/16] %v116, 128
    %133 = vxpose.xlu0.b32.cont [5/16] %v117, 128
    %134 = vxpose.xlu0.b32.cont [6/16] %v118, 128
    %135 = vxpose.xlu0.b32.cont [7/16] %v119, 128
    %136 = vxpose.xlu0.b32.cont [8/16] %v120, 128
    %137 = vxpose.xlu0.b32.cont [9/16] %v121, 128
    %138 = vxpose.xlu0.b32.cont [10/16] %v122, 128
    %139 = vxpose.xlu0.b32.cont [11/16] %v123, 128
    %140 = vxpose.xlu0.b32.cont [12/16] %v124, 128
    %141 = vxpose.xlu0.b32.cont [13/16] %v125, 128
    %142 = vxpose.xlu0.b32.cont [14/16] %v126, 128
    %143 = vxpose.xlu0.b32.cont [15/16] %v127, 128
    %144 = vxpose.xlu0.b32.end [16/16] %v128, 128
    %v145 = vpop.trf.xlu0
    %v146 = vpop.trf.xlu0
    %v147 = vpop.trf.xlu0
    %v148 = vpop.trf.xlu0
    %v149 = vpop.trf.xlu0
    %v150 = vpop.trf.xlu0
    %v151 = vpop.trf.xlu0
    %v152 = vpop.trf.xlu0
    %v153 = vpop.trf.xlu0
    %v154 = vpop.trf.xlu0
    %v155 = vpop.trf.xlu0
    %v156 = vpop.trf.xlu0
    %v157 = vpop.trf.xlu0
    %v158 = vpop.trf.xlu0
    %v159 = vpop.trf.xlu0
    %v160 = vpop.trf.xlu0
    %v161 = vand.u32 2147483647, %v145
    %vm162 = vcmp.le.f32.partialorder %v161, 0.7853982
    %vm163 = vcmp.lt.s32.totalorder %v145, 0
    %v164 = vand.u32 %v145, 2139095040
    %v165 = vshrl.u32 %v164, 23
    %v166 = vsub.s32 %v165, 127
    %v167 = vand.u32 2147483647, %v145
    %v168 = vand.u32 %v167, 8388607
    %v169 = vor.u32 %v168, 8388608
    %v170 = vsub.s32 0, %v169
    %v171 = vadd.s32 %v166, 1
    %vm172 = vcmp.gt.s32.totalorder %v171, 0
    %v173 = vsel %vm172, %v171, 0
    %v174 = vshrl.u32 %v173, 5
    %v175 = vand.u32 %v173, 31
    %v176 = vsub.s32 32, %v175
    %v177 = vshrl.u32 683565275, %v176
    %v178 = vshll.u32 683565275, %v175
    %v179 = vshrl.u32 2475754826, %v176
    %v180 = vor.u32 %v178, %v179
    %v181 = vshll.u32 2475754826, %v175
    %v182 = vshrl.u32 2131351028, %v176
    %v183 = vor.u32 %v181, %v182
    %v184 = vshll.u32 2131351028, %v175
    %v185 = vshrl.u32 2102212464, %v176
    %v186 = vor.u32 %v184, %v185
    %v187 = vshll.u32 2102212464, %v175
    %v188 = vshrl.u32 920167782, %v176
    %v189 = vor.u32 %v187, %v188
    %v190 = vshll.u32 920167782, %v175
    %v191 = vshrl.u32 1326507024, %v176
    %v192 = vor.u32 %v190, %v191
    %vm193 = vcmp.lt.s32.totalorder %v174, 1
    %vm194 = vcmp.lt.s32.totalorder %v174, 2
    %vm195 = vcmp.lt.s32.totalorder %v174, 3
    %vm196 = vcmp.lt.s32.totalorder %v174, 4
    %v197 = vsel %vm193, %v177, %v180
    %v198 = vsel %vm196, %v186, 2102212464
    %v199 = vsel %vm195, %v183, %v198
    %v200 = vsel %vm194, %v197, %v199
    %v201 = vsel %vm193, %v180, %v183
    %v202 = vsel %vm196, %v189, 920167782
    %v203 = vsel %vm195, %v186, %v202
    %v204 = vsel %vm194, %v201, %v203
    %v205 = vsel %vm193, %v183, %v186
    %v206 = vsel %vm196, %v192, 1326507024
    %v207 = vsel %vm195, %v189, %v206
    %v208 = vsel %vm194, %v205, %v207
    %v209 = vshll.u32 %v169, 8
    %v210 = vmul.u32.u64.compose %v209, %v208
    %v211 = vextract.low.u32 %v210
    %v212 = vextract.high.u32 %v210
    %v213 = vmul.u32.u64.compose %v209, %v204
    %v214 = vextract.low.u32 %v213
    %v215 = vextract.high.u32 %v213
    %v216 = vmul.u32 %v209, %v200
    %v217 = vadd.s32 %v212, %v214
    %vm218 = vc.u32 %v212, %v214
    %v219 = vadd.s32 %v215, 1
    %v220 = vsel %vm218, %v219, %v215
    %v221 = vadd.s32 %v216, %v220
    %v222 = vadd.s32 %v221, 536870912
    %v223 = vshrl.u32 %v222, 30
    %v224 = vshll.u32 %v223, 30
    %v225 = vsub.s32 %v221, %v224
    %vm226 = vcmp.lt.s32.totalorder %v225, 0
    %v227 = vsub.s32 0, %v225
    %v228 = vsel %vm226, %v227, %v225
    %v229 = vclz %v228
    %v230 = vsub.s32 %v229, 2
    %vm231 = vcmp.gt.s32.totalorder 0, %v230
    %v232 = vsel %vm231, 0, %v230
    %v233 = vsub.s32 32, %v232
    %v234 = vshll.u32 %v225, %v232
    %v235 = vshrl.u32 %v217, %v233
    %v236 = vor.u32 %v234, %v235
    %v237 = vsub.s32 4294967266, %v232
    %v238 = vadd.s32 %v237, 127
    %v239 = vshll.u32 %v238, 23
    %v240 = vor.u32 4788187, %v239
    %v241 = vand.u32 2147483647, %v240
    %v243 = vcvt.s32.f32 %v236
    %v244 = vmul.f32 %v243, %v241
    %v245 = vxor.u32 %v244, 2147483648
    %v246 = vsel %vm163, %v245, %v244
    %v247 = vsub.s32 4, %v223
    %v248 = vsel %vm163, %v247, %v223
    %v249 = vsel %vm162, %v145, %v246
    %v250 = vsel %vm162, 0, %v248
    %v251 = vcosq.f32.pop %v249
    %v252 = vsinq.f32.pop %v249
    %vm253 = vweird.f32 %v145
    %v254 = vand.u32 %v250, 3
    %vm255 = vcmp.lt.s32.totalorder %v254, 2
    %vm256 = vcmp.eq.s32.totalorder %v254, 0
    %v257 = vxor.u32 %v252, 2147483648
    %v258 = vsel %vm256, %v251, %v257
    %vm259 = vcmp.eq.s32.totalorder %v254, 2
    %v260 = vxor.u32 %v251, 2147483648
    %v261 = vsel %vm259, %v260, %v252
    %v262 = vsel %vm255, %v258, %v261
    %v263 = vsel %vm253, nan, %v262
    %v264 = vand.u32 2147483647, %v146
    %vm265 = vcmp.le.f32.partialorder %v264, 0.7853982
    %vm266 = vcmp.lt.s32.totalorder %v146, 0
    %v267 = vand.u32 %v146, 2139095040
    %v268 = vshrl.u32 %v267, 23
    %v269 = vsub.s32 %v268, 127
    %v270 = vand.u32 2147483647, %v146
    %v271 = vand.u32 %v270, 8388607
    %v272 = vor.u32 %v271, 8388608
    %v273 = vsub.s32 0, %v272
    %v274 = vadd.s32 %v269, 1
    %vm275 = vcmp.gt.s32.totalorder %v274, 0
    %v276 = vsel %vm275, %v274, 0
    %v277 = vshrl.u32 %v276, 5
    %v278 = vand.u32 %v276, 31
    %v279 = vsub.s32 32, %v278
    %v280 = vshrl.u32 683565275, %v279
    %v281 = vshll.u32 683565275, %v278
    %v282 = vshrl.u32 2475754826, %v279
    %v283 = vor.u32 %v281, %v282
    %v284 = vshll.u32 2475754826, %v278
    %v285 = vshrl.u32 2131351028, %v279
    %v286 = vor.u32 %v284, %v285
    %v287 = vshll.u32 2131351028, %v278
    %v288 = vshrl.u32 2102212464, %v279
    %v289 = vor.u32 %v287, %v288
    %v290 = vshll.u32 2102212464, %v278
    %v291 = vshrl.u32 920167782, %v279
    %v292 = vor.u32 %v290, %v291
    %v293 = vshll.u32 920167782, %v278
    %v294 = vshrl.u32 1326507024, %v279
    %v295 = vor.u32 %v293, %v294
    %vm296 = vcmp.lt.s32.totalorder %v277, 1
    %vm297 = vcmp.lt.s32.totalorder %v277, 2
    %vm298 = vcmp.lt.s32.totalorder %v277, 3
    %vm299 = vcmp.lt.s32.totalorder %v277, 4
    %v300 = vsel %vm296, %v280, %v283
    %v301 = vsel %vm299, %v289, 2102212464
    %v302 = vsel %vm298, %v286, %v301
    %v303 = vsel %vm297, %v300, %v302
    %v304 = vsel %vm296, %v283, %v286
    %v305 = vsel %vm299, %v292, 920167782
    %v306 = vsel %vm298, %v289, %v305
    %v307 = vsel %vm297, %v304, %v306
    %v308 = vsel %vm296, %v286, %v289
    %v309 = vsel %vm299, %v295, 1326507024
    %v310 = vsel %vm298, %v292, %v309
    %v311 = vsel %vm297, %v308, %v310
    %v312 = vshll.u32 %v272, 8
    %v313 = vmul.u32.u64.compose %v312, %v311
    %v314 = vextract.low.u32 %v313
    %v315 = vextract.high.u32 %v313
    %v316 = vmul.u32.u64.compose %v312, %v307
    %v317 = vextract.low.u32 %v316
    %v318 = vextract.high.u32 %v316
    %v319 = vmul.u32 %v312, %v303
    %v320 = vadd.s32 %v315, %v317
    %vm321 = vc.u32 %v315, %v317
    %v322 = vadd.s32 %v318, 1
    %v323 = vsel %vm321, %v322, %v318
    %v324 = vadd.s32 %v319, %v323
    %v325 = vadd.s32 %v324, 536870912
    %v326 = vshrl.u32 %v325, 30
    %v327 = vshll.u32 %v326, 30
    %v328 = vsub.s32 %v324, %v327
    %vm329 = vcmp.lt.s32.totalorder %v328, 0
    %v330 = vsub.s32 0, %v328
    %v331 = vsel %vm329, %v330, %v328
    %v332 = vclz %v331
    %v333 = vsub.s32 %v332, 2
    %vm334 = vcmp.gt.s32.totalorder 0, %v333
    %v335 = vsel %vm334, 0, %v333
    %v336 = vsub.s32 32, %v335
    %v337 = vshll.u32 %v328, %v335
    %v338 = vshrl.u32 %v320, %v336
    %v339 = vor.u32 %v337, %v338
    %v340 = vsub.s32 4294967266, %v335
    %v341 = vadd.s32 %v340, 127
    %v342 = vshll.u32 %v341, 23
    %v343 = vor.u32 4788187, %v342
    %v344 = vand.u32 2147483647, %v343
    %v346 = vcvt.s32.f32 %v339
    %v347 = vmul.f32 %v346, %v344
    %v348 = vxor.u32 %v347, 2147483648
    %v349 = vsel %vm266, %v348, %v347
    %v350 = vsub.s32 4, %v326
    %v351 = vsel %vm266, %v350, %v326
    %v352 = vsel %vm265, %v146, %v349
    %v353 = vsel %vm265, 0, %v351
    %v354 = vcosq.f32.pop %v352
    %v355 = vsinq.f32.pop %v352
    %vm356 = vweird.f32 %v146
    %v357 = vand.u32 %v353, 3
    %vm358 = vcmp.lt.s32.totalorder %v357, 2
    %vm359 = vcmp.eq.s32.totalorder %v357, 0
    %v360 = vxor.u32 %v355, 2147483648
    %v361 = vsel %vm359, %v354, %v360
    %vm362 = vcmp.eq.s32.totalorder %v357, 2
    %v363 = vxor.u32 %v354, 2147483648
    %v364 = vsel %vm362, %v363, %v355
    %v365 = vsel %vm358, %v361, %v364
    %v366 = vsel %vm356, nan, %v365
    %v367 = vand.u32 2147483647, %v145
    %vm368 = vcmp.le.f32.partialorder %v367, 0.7853982
    %vm369 = vcmp.lt.s32.totalorder %v145, 0
    %v370 = vand.u32 %v145, 2139095040
    %v371 = vshrl.u32 %v370, 23
    %v372 = vsub.s32 %v371, 127
    %v373 = vand.u32 2147483647, %v145
    %v374 = vand.u32 %v373, 8388607
    %v375 = vor.u32 %v374, 8388608
    %v376 = vsub.s32 0, %v375
    %v377 = vadd.s32 %v372, 1
    %vm378 = vcmp.gt.s32.totalorder %v377, 0
    %v379 = vsel %vm378, %v377, 0
    %v380 = vshrl.u32 %v379, 5
    %v381 = vand.u32 %v379, 31
    %v382 = vsub.s32 32, %v381
    %v383 = vshrl.u32 683565275, %v382
    %v384 = vshll.u32 683565275, %v381
    %v385 = vshrl.u32 2475754826, %v382
    %v386 = vor.u32 %v384, %v385
    %v387 = vshll.u32 2475754826, %v381
    %v388 = vshrl.u32 2131351028, %v382
    %v389 = vor.u32 %v387, %v388
    %v390 = vshll.u32 2131351028, %v381
    %v391 = vshrl.u32 2102212464, %v382
    %v392 = vor.u32 %v390, %v391
    %v393 = vshll.u32 2102212464, %v381
    %v394 = vshrl.u32 920167782, %v382
    %v395 = vor.u32 %v393, %v394
    %v396 = vshll.u32 920167782, %v381
    %v397 = vshrl.u32 1326507024, %v382
    %v398 = vor.u32 %v396, %v397
    %vm399 = vcmp.lt.s32.totalorder %v380, 1
    %vm400 = vcmp.lt.s32.totalorder %v380, 2
    %vm401 = vcmp.lt.s32.totalorder %v380, 3
    %vm402 = vcmp.lt.s32.totalorder %v380, 4
    %v403 = vsel %vm399, %v383, %v386
    %v404 = vsel %vm402, %v392, 2102212464
    %v405 = vsel %vm401, %v389, %v404
    %v406 = vsel %vm400, %v403, %v405
    %v407 = vsel %vm399, %v386, %v389
    %v408 = vsel %vm402, %v395, 920167782
    %v409 = vsel %vm401, %v392, %v408
    %v410 = vsel %vm400, %v407, %v409
    %v411 = vsel %vm399, %v389, %v392
    %v412 = vsel %vm402, %v398, 1326507024
    %v413 = vsel %vm401, %v395, %v412
    %v414 = vsel %vm400, %v411, %v413
    %v415 = vshll.u32 %v375, 8
    %v416 = vmul.u32.u64.compose %v415, %v414
    %v417 = vextract.low.u32 %v416
    %v418 = vextract.high.u32 %v416
    %v419 = vmul.u32.u64.compose %v415, %v410
    %v420 = vextract.low.u32 %v419
    %v421 = vextract.high.u32 %v419
    %v422 = vmul.u32 %v415, %v406
    %v423 = vadd.s32 %v418, %v420
    %vm424 = vc.u32 %v418, %v420
    %v425 = vadd.s32 %v421, 1
    %v426 = vsel %vm424, %v425, %v421
    %v427 = vadd.s32 %v422, %v426
    %v428 = vadd.s32 %v427, 536870912
    %v429 = vshrl.u32 %v428, 30
    %v430 = vshll.u32 %v429, 30
    %v431 = vsub.s32 %v427, %v430
    %vm432 = vcmp.lt.s32.totalorder %v431, 0
    %v433 = vsub.s32 0, %v431
    %v434 = vsel %vm432, %v433, %v431
    %v435 = vclz %v434
    %v436 = vsub.s32 %v435, 2
    %vm437 = vcmp.gt.s32.totalorder 0, %v436
    %v438 = vsel %vm437, 0, %v436
    %v439 = vsub.s32 32, %v438
    %v440 = vshll.u32 %v431, %v438
    %v441 = vshrl.u32 %v423, %v439
    %v442 = vor.u32 %v440, %v441
    %v443 = vsub.s32 4294967266, %v438
    %v444 = vadd.s32 %v443, 127
    %v445 = vshll.u32 %v444, 23
    %v446 = vor.u32 4788187, %v445
    %v447 = vand.u32 2147483647, %v446
    %v449 = vcvt.s32.f32 %v442
    %v450 = vmul.f32 %v449, %v447
    %v451 = vxor.u32 %v450, 2147483648
    %v452 = vsel %vm369, %v451, %v450
    %v453 = vsub.s32 4, %v429
    %v454 = vsel %vm369, %v453, %v429
    %v455 = vsel %vm368, %v145, %v452
    %v456 = vsel %vm368, 0, %v454
    %v457 = vcosq.f32.pop %v455
    %v458 = vsinq.f32.pop %v455
    %vm459 = vweird.f32 %v145
    %v460 = vadd.s32 %v456, 3
    %v461 = vand.u32 %v460, 3
    %vm462 = vcmp.lt.s32.totalorder %v461, 2
    %vm463 = vcmp.eq.s32.totalorder %v461, 0
    %v464 = vxor.u32 %v458, 2147483648
    %v465 = vsel %vm463, %v457, %v464
    %vm466 = vcmp.eq.s32.totalorder %v461, 2
    %v467 = vxor.u32 %v457, 2147483648
    %v468 = vsel %vm466, %v467, %v458
    %v469 = vsel %vm462, %v465, %v468
    %v470 = vsel %vm459, nan, %v469
    %v471 = vand.u32 2147483647, %v146
    %vm472 = vcmp.le.f32.partialorder %v471, 0.7853982
    %vm473 = vcmp.lt.s32.totalorder %v146, 0
    %v474 = vand.u32 %v146, 2139095040
    %v475 = vshrl.u32 %v474, 23
    %v476 = vsub.s32 %v475, 127
    %v477 = vand.u32 2147483647, %v146
    %v478 = vand.u32 %v477, 8388607
    %v479 = vor.u32 %v478, 8388608
    %v480 = vsub.s32 0, %v479
    %v481 = vadd.s32 %v476, 1
    %vm482 = vcmp.gt.s32.totalorder %v481, 0
    %v483 = vsel %vm482, %v481, 0
    %v484 = vshrl.u32 %v483, 5
    %v485 = vand.u32 %v483, 31
    %v486 = vsub.s32 32, %v485
    %v487 = vshrl.u32 683565275, %v486
    %v488 = vshll.u32 683565275, %v485
    %v489 = vshrl.u32 2475754826, %v486
    %v490 = vor.u32 %v488, %v489
    %v491 = vshll.u32 2475754826, %v485
    %v492 = vshrl.u32 2131351028, %v486
    %v493 = vor.u32 %v491, %v492
    %v494 = vshll.u32 2131351028, %v485
    %v495 = vshrl.u32 2102212464, %v486
    %v496 = vor.u32 %v494, %v495
    %v497 = vshll.u32 2102212464, %v485
    %v498 = vshrl.u32 920167782, %v486
    %v499 = vor.u32 %v497, %v498
    %v500 = vshll.u32 920167782, %v485
    %v501 = vshrl.u32 1326507024, %v486
    %v502 = vor.u32 %v500, %v501
    %vm503 = vcmp.lt.s32.totalorder %v484, 1
    %vm504 = vcmp.lt.s32.totalorder %v484, 2
    %vm505 = vcmp.lt.s32.totalorder %v484, 3
    %vm506 = vcmp.lt.s32.totalorder %v484, 4
    %v507 = vsel %vm503, %v487, %v490
    %v508 = vsel %vm506, %v496, 2102212464
    %v509 = vsel %vm505, %v493, %v508
    %v510 = vsel %vm504, %v507, %v509
    %v511 = vsel %vm503, %v490, %v493
    %v512 = vsel %vm506, %v499, 920167782
    %v513 = vsel %vm505, %v496, %v512
    %v514 = vsel %vm504, %v511, %v513
    %v515 = vsel %vm503, %v493, %v496
    %v516 = vsel %vm506, %v502, 1326507024
    %v517 = vsel %vm505, %v499, %v516
    %v518 = vsel %vm504, %v515, %v517
    %v519 = vshll.u32 %v479, 8
    %v520 = vmul.u32.u64.compose %v519, %v518
    %v521 = vextract.low.u32 %v520
    %v522 = vextract.high.u32 %v520
    %v523 = vmul.u32.u64.compose %v519, %v514
    %v524 = vextract.low.u32 %v523
    %v525 = vextract.high.u32 %v523
    %v526 = vmul.u32 %v519, %v510
    %v527 = vadd.s32 %v522, %v524
    %vm528 = vc.u32 %v522, %v524
    %v529 = vadd.s32 %v525, 1
    %v530 = vsel %vm528, %v529, %v525
    %v531 = vadd.s32 %v526, %v530
    %v532 = vadd.s32 %v531, 536870912
    %v533 = vshrl.u32 %v532, 30
    %v534 = vshll.u32 %v533, 30
    %v535 = vsub.s32 %v531, %v534
    %vm536 = vcmp.lt.s32.totalorder %v535, 0
    %v537 = vsub.s32 0, %v535
    %v538 = vsel %vm536, %v537, %v535
    %v539 = vclz %v538
    %v540 = vsub.s32 %v539, 2
    %vm541 = vcmp.gt.s32.totalorder 0, %v540
    %v542 = vsel %vm541, 0, %v540
    %v543 = vsub.s32 32, %v542
    %v544 = vshll.u32 %v535, %v542
    %v545 = vshrl.u32 %v527, %v543
    %v546 = vor.u32 %v544, %v545
    %v547 = vsub.s32 4294967266, %v542
    %v548 = vadd.s32 %v547, 127
    %v549 = vshll.u32 %v548, 23
    %v550 = vor.u32 4788187, %v549
    %v551 = vand.u32 2147483647, %v550
    %v553 = vcvt.s32.f32 %v546
    %v554 = vmul.f32 %v553, %v551
    %v555 = vxor.u32 %v554, 2147483648
    %v556 = vsel %vm473, %v555, %v554
    %v557 = vsub.s32 4, %v533
    %v558 = vsel %vm473, %v557, %v533
    %v559 = vsel %vm472, %v146, %v556
    %v560 = vsel %vm472, 0, %v558
    %v561 = vcosq.f32.pop %v559
    %v562 = vsinq.f32.pop %v559
    %vm563 = vweird.f32 %v146
    %v564 = vadd.s32 %v560, 3
    %v565 = vand.u32 %v564, 3
    %vm566 = vcmp.lt.s32.totalorder %v565, 2
    %vm567 = vcmp.eq.s32.totalorder %v565, 0
    %v568 = vxor.u32 %v562, 2147483648
    %v569 = vsel %vm567, %v561, %v568
    %vm570 = vcmp.eq.s32.totalorder %v565, 2
    %v571 = vxor.u32 %v561, 2147483648
    %v572 = vsel %vm570, %v571, %v562
    %v573 = vsel %vm566, %v569, %v572
    %v574 = vsel %vm563, nan, %v573
    %v575 = vpack.c.bf16 %v366, %v263
    %v577 = vunpack.c.l.b16 %v575
    %v578 = vunpack.c.h.b16 %v575
    %v579 = vpack.c.b16 %v577, %v577
    %v580 = vpack.c.b16 %v578, %v578
    %583 = vst [vmem:[#allocation5] sm:$0xf] %v579
    %584 = vst [vmem:[#allocation5 + $0x8] sm:$0xf] %v580
    %585 = vst [vmem:[#allocation5 + $0x4] sm:$0xf] %v579
    %586 = vst [vmem:[#allocation5 + $0xc] sm:$0xf] %v580
    %v587 = vpack.c.bf16 %v574, %v470
    %v589 = vunpack.c.l.b16 %v587
    %v590 = vunpack.c.h.b16 %v587
    %v591 = vpack.c.b16 %v589, %v589
    %v592 = vpack.c.b16 %v590, %v590
    %595 = vst [vmem:[#allocation6] sm:$0xf] %v591
    %596 = vst [vmem:[#allocation6 + $0x8] sm:$0xf] %v592
    %597 = vst [vmem:[#allocation6 + $0x4] sm:$0xf] %v591
    %598 = vst [vmem:[#allocation6 + $0xc] sm:$0xf] %v592
    // Predicated region
    $region10: #{tpu_custom_call.1} parent=1 // pred_check
      _
    $region11: #{tpu_custom_call.1} parent=1 // pred_check_branch
      %600 = sbr.rel (0) target = $region13
    $region12: #{tpu_custom_call.1} parent=1 // pred_region
      %s602 = ssub.s32 256, 256
      %603 = vsyncadd [#allocation4], %s602
      %s604 = sshll.u32 [#allocation5], 4
      %s605 = int_to_ptr.vmem [resolvable:$true] %s604
      %610 = dma.vmem_to_hbm [thread:$0]  %s605, 256, %s1, [#allocation4], 128, 128, 8
    $region13: #{tpu_custom_call.1} parent=1 // pred_fallthru
      _
    // Predicated region
    $region14: #{tpu_custom_call.1} parent=1 // pred_check
      _
    $region15: #{tpu_custom_call.1} parent=1 // pred_check_branch
      %612 = sbr.rel (0) target = $region17
    $region16: #{tpu_custom_call.1} parent=1 // pred_region
      %s614 = ssub.s32 256, 256
      %615 = vsyncadd [#allocation7], %s614
      %s616 = sshll.u32 [#allocation6], 4
      %s617 = int_to_ptr.vmem [resolvable:$true] %s616
      %622 = dma.vmem_to_hbm [thread:$0]  %s617, 256, %s2, [#allocation7], 128, 128, 8
    $region17: #{tpu_custom_call.1} parent=1 // pred_fallthru
      _
    // Predicated region
    $region18: #{tpu_custom_call.1} parent=1 // pred_check
      _
    $region19: #{tpu_custom_call.1} parent=1 // pred_check_branch
      %624 = sbr.rel (0) target = $region21
    $region20: #{tpu_custom_call.1} parent=1 // pred_region
      %625 = dma.done [#allocation4], 256
    $region21: #{tpu_custom_call.1} parent=1 // pred_fallthru
      _
    // Predicated region
    $region22: #{tpu_custom_call.1} parent=1 // pred_check
      _
    $region23: #{tpu_custom_call.1} parent=1 // pred_check_branch
      %627 = sbr.rel (0) target = $region25
    $region24: #{tpu_custom_call.1} parent=1 // pred_region
      %628 = dma.done [#allocation7], 256
    $region25: #{tpu_custom_call.1} parent=1 // pred_fallthru
      _
    %629 = vsyncpa [#allocation3], 1
    %630 = vsyncpa [#allocation4], 1
    %631 = vsyncpa [#allocation7], 1

</llo_original>
